<compile_context>
chip_gen: v7x
topology: tpu7x:2x2x1
jax: 0.10.0
libtpu: 0.0.40
codegen_flags: <defaults>
</compile_context>

<pallas_src>
import math

import jax
import jax.numpy as jnp
from jax.experimental import pallas as pl
from jax.experimental.pallas import tpu as pltpu


# --------------------------------------------------------------------------
# helpers
# --------------------------------------------------------------------------
def _round_up(x, m):
    return ((x + m - 1) // m) * m


def _largest_tile(n, cap, quantum):
    """Largest divisor of n that is <= cap and a multiple of quantum.
    Falls back to the full extent n (block == full dim is always legal)."""
    t = min(n, cap)
    t -= t % quantum
    while t >= quantum:
        if n % t == 0:
            return t
        t -= quantum
    return n


# --------------------------------------------------------------------------
# kernels
# --------------------------------------------------------------------------
def _preproject_kernel(feat_ref, w_ref, temp_ref):
    """temp_tile = feat_tile @ W   (bf16 inputs, f32 MXU accumulate, bf16 out)."""
    temp_ref[...] = jnp.dot(
        feat_ref[...], w_ref[...], preferred_element_type=jnp.float32
    ).astype(temp_ref.dtype)


def _spmm_bias_kernel(adj_ref, temp_ref, b_ref, out_ref, acc_ref):
    """out_tile = sum_k adj[i, k_tile] @ temp[k_tile]  + bias  (f32 accumulator)."""
    k = pl.program_id(1)

    @pl.when(k == 0)
    def _():
        acc_ref[...] = jnp.zeros_like(acc_ref)

    acc_ref[...] += jnp.dot(
        adj_ref[...], temp_ref[...], preferred_element_type=jnp.float32
    )

    @pl.when(k == pl.num_programs(1) - 1)
    def _():
        out_ref[...] = (acc_ref[...] + b_ref[...]).astype(out_ref.dtype)


# --------------------------------------------------------------------------
# wrappers
# --------------------------------------------------------------------------
_VMEM_LIMIT = 32 * 1024 * 1024  # raises v5e's 16 MiB default; == v6e/v7x default


def _preproject(feat, w_pad, compute_dtype):
    """temp = feat @ w_pad, returned in compute_dtype (lane-dense columns)."""
    N, F_in = feat.shape
    out_p = w_pad.shape[1]
    tm = _largest_tile(N, 512, 8)
    return pl.pallas_call(
        _preproject_kernel,
        out_shape=jax.ShapeDtypeStruct((N, out_p), compute_dtype),
        grid_spec=pltpu.PrefetchScalarGridSpec(
            num_scalar_prefetch=0,
            grid=(N // tm,),
            in_specs=[
                pl.BlockSpec((tm, F_in), lambda i: (i, 0)),     # feat row tile
                pl.BlockSpec((F_in, out_p), lambda i: (0, 0)),  # W (full, padded)
            ],
            out_specs=pl.BlockSpec((tm, out_p), lambda i: (i, 0)),
        ),
        compiler_params=pltpu.CompilerParams(
            dimension_semantics=("parallel",),
            vmem_limit_bytes=_VMEM_LIMIT,
        ),
    )(feat.astype(compute_dtype), w_pad.astype(compute_dtype))


def _spmm_bias(adj, temp, b_pad, compute_dtype):
    """ret = adj @ temp + bias, K-tiled with f32 accumulator. Output is f32."""
    N = adj.shape[0]
    out_p = temp.shape[1]

    tm = _largest_tile(N, 512, 8)
    # Prefer >=2 row steps once the problem is big enough so both TensorCores
    # (v7x megacore) get work; at tiny N a single resident step is faster.
    if N // tm < 2 and N >= 256:
        tm = _largest_tile(N, N // 2, 8)
    tk = _largest_tile(N, 1024, 128)

    return pl.pallas_call(
        _spmm_bias_kernel,
        out_shape=jax.ShapeDtypeStruct((N, out_p), jnp.float32),
        grid_spec=pltpu.PrefetchScalarGridSpec(
            num_scalar_prefetch=0,
            grid=(N // tm, N // tk),                       # reduction axis last
            in_specs=[
                pl.BlockSpec((tm, tk), lambda i, k: (i, k)),      # adj tile (bf16)
                pl.BlockSpec((tk, out_p), lambda i, k: (k, 0)),   # temp tile (bf16)
                pl.BlockSpec((1, out_p), lambda i, k: (0, 0)),    # bias (f32)
            ],
            out_specs=pl.BlockSpec((tm, out_p), lambda i, k: (i, 0)),
            scratch_shapes=[pltpu.VMEM((tm, out_p), jnp.float32)],
        ),
        compiler_params=pltpu.CompilerParams(
            dimension_semantics=("parallel", "arbitrary"),
            vmem_limit_bytes=_VMEM_LIMIT,
        ),
    )(adj.astype(compute_dtype), temp, b_pad)


def _graph_conv(adj, feat, weight, bias, *, compute_dtype=jnp.bfloat16):
    """adj @ (feat @ weight) + bias   with lane-dense padding on the out dim."""
    F_in = feat.shape[1]
    F_out = weight.shape[1]
    out_p = _round_up(F_out, 128)

    w_pad = jnp.pad(weight, ((0, 0), (0, out_p - F_out)))
    if bias is None:
        bias = jnp.zeros((F_out,), jnp.float32)
    b_pad = jnp.pad(bias.astype(jnp.float32), (0, out_p - F_out)).reshape(1, out_p)

    temp = _preproject(feat, w_pad, compute_dtype)          # (N, out_p) bf16
    ret_p = _spmm_bias(adj, temp, b_pad, compute_dtype)     # (N, out_p) f32
    return ret_p[:, :F_out]


def node_edge_conv_node(H_v, H_e, adj_e, adj_v, T, weight, weight_sec, bias,
                        *, compute_dtype=jnp.bfloat16):
    """NodeEdgeConv.forward, node_layer=True. Returns (ret, H_e)."""
    del adj_e, T, weight_sec  # unused in the node-layer forward (matches PyTorch)
    ret = _graph_conv(adj_v, H_v, weight, bias, compute_dtype=compute_dtype)
    return ret, H_e


def node_edge_conv_edge(H_v, H_e, adj_e, adj_v, T, weight, weight_sec, bias,
                        *, compute_dtype=jnp.bfloat16):
    """NodeEdgeConv.forward, node_layer=False. Returns (H_v, ret)."""
    del adj_v, T, weight_sec  # unused in the edge-layer forward (matches PyTorch)
    ret = _graph_conv(adj_e, H_e, weight, bias, compute_dtype=compute_dtype)
    return H_v, ret


def kaiming_uniform(key, shape, dtype=jnp.float32):
    """nn.init.kaiming_uniform_(nonlinearity='relu') on a 2-D tensor."""
    fan_in = shape[1]
    bound = math.sqrt(3.0) * math.sqrt(2.0) / math.sqrt(fan_in)
    return jax.random.uniform(key, shape, dtype, minval=-bound, maxval=bound)


# --------------------------------------------------------------------------
# demo / self-check
# --------------------------------------------------------------------------
if __name__ == "__main__":
    key = jax.random.PRNGKey(0)
    k_hv, k_he, k_adjv, k_adje, k_T, k_w, k_ws, k_we, k_wes = jax.random.split(key, 9)

    # small shapes consistent with the module
    N_v, N_e = 128, 64
    in_v, out_v = 32, 64
    in_e, out_e = 16, 16

    H_v = jax.random.normal(k_hv, (N_v, in_v), jnp.float32)
    H_e = jax.random.normal(k_he, (N_e, in_e), jnp.float32)
    adj_v = jax.random.normal(k_adjv, (N_v, N_v), jnp.float32)
    adj_e = jax.random.normal(k_adje, (N_e, N_e), jnp.float32)
    T = jax.random.normal(k_T, (N_v, N_e), jnp.float32)

    # node-layer parameters
    weight_v = kaiming_uniform(k_w, (in_v, out_v))
    weight_sec_v = kaiming_uniform(k_ws, (in_e, in_v))
    bias_v = jnp.zeros((out_v,), jnp.float32)

    # edge-layer parameters
    weight_e = kaiming_uniform(k_we, (in_e, out_e))
    weight_sec_e = kaiming_uniform(k_wes, (in_v, in_e))
    bias_e = jnp.zeros((out_e,), jnp.float32)

    bf16 = jnp.bfloat16

    # ---------------- node branch ----------------
    ret_v, he_out = node_edge_conv_node(
        H_v, H_e, adj_e, adj_v, T, weight_v, weight_sec_v, bias_v)
    jax.block_until_ready((ret_v, he_out))

    # reference with the same bf16 rounding of the streamed operands
    temp_ref = jnp.dot(H_v.astype(bf16), weight_v.astype(bf16),
                       preferred_element_type=jnp.float32).astype(bf16)
    ref_bf16 = jnp.dot(adj_v.astype(bf16), temp_ref,
                       preferred_element_type=jnp.float32) + bias_v
    ref_f32 = adj_v @ (H_v @ weight_v) + bias_v

    assert ret_v.shape == (N_v, out_v)
    assert ret_v.dtype == jnp.float32
    assert jnp.allclose(ret_v, ref_bf16, atol=5e-2, rtol=1e-2)
    assert jnp.allclose(ret_v, ref_f32, atol=5e-1, rtol=5e-2)
    assert jnp.array_equal(he_out, H_e)

    # ---------------- edge branch ----------------
    hv_out, ret_e = node_edge_conv_edge(
        H_v, H_e, adj_e, adj_v, T, weight_e, weight_sec_e, bias_e)
    jax.block_until_ready((hv_out, ret_e))

    temp_e_ref = jnp.dot(H_e.astype(bf16), weight_e.astype(bf16),
                         preferred_element_type=jnp.float32).astype(bf16)
    ref_e_bf16 = jnp.dot(adj_e.astype(bf16), temp_e_ref,
                         preferred_element_type=jnp.float32) + bias_e
    ref_e_f32 = adj_e @ (H_e @ weight_e) + bias_e

    assert ret_e.shape == (N_e, out_e)
    assert jnp.allclose(ret_e, ref_e_bf16, atol=5e-2, rtol=1e-2)
    assert jnp.allclose(ret_e, ref_e_f32, atol=5e-1, rtol=5e-2)
    assert jnp.array_equal(hv_out, H_v)

    # TODO(synk): expose compute_dtype=jnp.float32 if bit-exact f32 parity with
    # the PyTorch module is required (the bf16 streaming path trades ~1e-3
    # relative error for ~2x HBM/MXU throughput).
    print("KERNEL_OK")
</pallas_src>

<mosaic_0001>
module attributes {stable_mosaic.version = 11 : i64} {
  func.func @_preproject_kernel(%arg0: i32, %arg1: memref<128x32xbf16, #tpu.memory_space<vmem>>, %arg2: memref<32x128xbf16, #tpu.memory_space<vmem>>, %arg3: memref<128x128xbf16, #tpu.memory_space<vmem>>) attributes {dimension_semantics = [#tpu.dimension_semantics<parallel>], iteration_bounds = array<i64: 1>, scalar_prefetch = 0 : i64, scratch_operands = 0 : i64, tpu.core_type = #tpu.core_type<tc>, window_params = [{transform_indices = @transform_0, window_bounds = array<i64: 128, 32>}, {pipeline_mode = #tpu.pipeline_mode<synchronous>, transform_indices = @transform_1, window_bounds = array<i64: 32, 128>}, {transform_indices = @transform_2, window_bounds = array<i64: 128, 128>}]} {
    %c0 = arith.constant 0 : index
    %c0_0 = arith.constant 0 : index
    %0 = vector.load %arg1[%c0, %c0_0] : memref<128x32xbf16, #tpu.memory_space<vmem>>, vector<128x32xbf16>
    %c0_1 = arith.constant 0 : index
    %c0_2 = arith.constant 0 : index
    %1 = vector.load %arg2[%c0_1, %c0_2] : memref<32x128xbf16, #tpu.memory_space<vmem>>, vector<32x128xbf16>
    %cst = arith.constant dense<0.000000e+00> : vector<128x128xf32>
    %2 = tpu.matmul %0, %1, %cst {dimension_numbers = #tpu.dot_dimension_numbers<[1], [0], [0], [1], [0, 0, 1, 1], [], []>} : vector<128x32xbf16>, vector<32x128xbf16>, vector<128x128xf32> -> vector<128x128xf32>
    %3 = arith.truncf %2 : vector<128x128xf32> to vector<128x128xbf16>
    %c0_3 = arith.constant 0 : index
    %c0_4 = arith.constant 0 : index
    %4 = vector.load %arg3[%c0_3, %c0_4] : memref<128x128xbf16, #tpu.memory_space<vmem>>, vector<128x128xbf16>
    tpu.vector_store %arg3[%c0_3, %c0_4], %3 {strides = array<i32>} : memref<128x128xbf16, #tpu.memory_space<vmem>>, vector<128x128xbf16>,
    return
  }
  func.func @transform_0(%arg0: i32) -> (i32, i32) {
    %c0_i32 = arith.constant 0 : i32
    %c0_i32_0 = arith.constant 0 : i32
    return %arg0, %c0_i32 : i32, i32
  }
  func.func @transform_1(%arg0: i32) -> (i32, i32) {
    %c0_i32 = arith.constant 0 : i32
    %c0_i32_0 = arith.constant 0 : i32
    %c0_i32_1 = arith.constant 0 : i32
    return %c0_i32, %c0_i32_0 : i32, i32
  }
  func.func @transform_2(%arg0: i32) -> (i32, i32) {
    %c0_i32 = arith.constant 0 : i32
    %c0_i32_0 = arith.constant 0 : i32
    return %arg0, %c0_i32 : i32, i32
  }
}

</mosaic_0001>

<llo_original>
// kernel: tpu_custom_call.1
$region0: #{tpu_custom_call.1}
  #allocation0 [shape = 'u32[]', space=smem, size = 0x4, offset = 0x4, fixed_abs, tag = 'smem constant byte address 0x4 - core index']
  #allocation1 [shape = 'u32[144,128]{1,0:T(1,128)}', space=vmem, size = 0x12000, scoped, tag = 'internal scratch']
  %s0 = inlined_call_operand.vmem [shape: bf16[128,32], index: 0, kind: input, shape index: {}]
  %s1 = inlined_call_operand.vmem [shape: bf16[32,128], index: 1, kind: input, shape index: {}]
  %s2 = inlined_call_operand.hbm [shape: bf16[128,128], index: 2, kind: output, shape index: {}]
  %s3 = sld [smem:[#allocation0]]
  $region18: #{tpu_custom_call.1} parent=0
    _
  %s5 = ssub.s32 1, %s3
  %s6 = scalar_select 0, %s5, %s3
  $region1: #{tpu_custom_call.1} parent=0
    #allocation2 [shape = 'u8[32768]{0}', space=vmem, size = 0x8000, scoped, tag = 'output window, operand 0, single buffered']
    #allocation3 [shape = 's32[1]{0}', space=sflag, size = 0x4, scoped, tag = 'scoped memory for tpu_custom_call.1']
    %7 = vsyncpa [#allocation3], 0
    // Predicated region
    $region2: #{tpu_custom_call.1} parent=1 // pred_check
      _
    $region3: #{tpu_custom_call.1} parent=1 // pred_check_branch
      %9 = sbr.rel (0) target = $region5
    $region4: #{tpu_custom_call.1} parent=1 // pred_region
      _
    $region5: #{tpu_custom_call.1} parent=1 // pred_fallthru
      _
    // Predicated region
    $region6: #{tpu_custom_call.1} parent=1 // pred_check
      _
    $region7: #{tpu_custom_call.1} parent=1 // pred_check_branch
      %11 = sbr.rel (0) target = $region9
    $region8: #{tpu_custom_call.1} parent=1 // pred_region
      _
    $region9: #{tpu_custom_call.1} parent=1 // pred_fallthru
      _
    %v13 = vld [vmem:[%s0] sm:$0xf]
    %v14 = vld [vmem:[%s0 + $0x4] sm:$0xf]
    %v15 = vld [vmem:[%s0 + $0x8] sm:$0xf]
    %v16 = vld [vmem:[%s0 + $0xc] sm:$0xf]
    %v17 = vld [vmem:[%s0 + $0x10] sm:$0xf]
    %v18 = vld [vmem:[%s0 + $0x14] sm:$0xf]
    %v19 = vld [vmem:[%s0 + $0x18] sm:$0xf]
    %v20 = vld [vmem:[%s0 + $0x1c] sm:$0xf]
    %v21 = vld [vmem:[%s0 + $0x20] sm:$0xf]
    %v22 = vld [vmem:[%s0 + $0x24] sm:$0xf]
    %v23 = vld [vmem:[%s0 + $0x28] sm:$0xf]
    %v24 = vld [vmem:[%s0 + $0x2c] sm:$0xf]
    %v25 = vld [vmem:[%s0 + $0x30] sm:$0xf]
    %v26 = vld [vmem:[%s0 + $0x34] sm:$0xf]
    %v27 = vld [vmem:[%s0 + $0x38] sm:$0xf]
    %v28 = vld [vmem:[%s0 + $0x3c] sm:$0xf]
    %v29 = vld [vmem:[%s1] sm:$0xf]
    %v30 = vld [vmem:[%s1 + $0x4] sm:$0xf]
    %v31 = vld [vmem:[%s1 + $0x8] sm:$0xf]
    %v32 = vld [vmem:[%s1 + $0xc] sm:$0xf]
    %v49 = vunpack.c.l.b16 %v13
    %v50 = vunpack.c.l.b16 %v14
    %v51 = vunpack.c.l.b16 %v15
    %v52 = vunpack.c.l.b16 %v16
    %v53 = vunpack.c.l.b16 %v17
    %v54 = vunpack.c.l.b16 %v18
    %v55 = vunpack.c.l.b16 %v19
    %v56 = vunpack.c.l.b16 %v20
    %v57 = vunpack.c.l.b16 %v21
    %v58 = vunpack.c.l.b16 %v22
    %v59 = vunpack.c.l.b16 %v23
    %v60 = vunpack.c.l.b16 %v24
    %v61 = vunpack.c.l.b16 %v25
    %v62 = vunpack.c.l.b16 %v26
    %v63 = vunpack.c.l.b16 %v27
    %v64 = vunpack.c.l.b16 %v28
    %v65 = vpack.c.b16 %v50, %v49
    %v66 = vpack.c.b16 %v52, %v51
    %v67 = vpack.c.b16 %v54, %v53
    %v68 = vpack.c.b16 %v56, %v55
    %v69 = vpack.c.b16 %v58, %v57
    %v70 = vpack.c.b16 %v60, %v59
    %v71 = vpack.c.b16 %v62, %v61
    %v72 = vpack.c.b16 %v64, %v63
    %v77 = vunpack.c.l.b16 %v29
    %v78 = vunpack.c.l.b16 %v30
    %v79 = vunpack.c.l.b16 %v31
    %v80 = vunpack.c.l.b16 %v32
    %v81 = vpack.c.b16 %v78, %v77
    %v82 = vpack.c.b16 %v80, %v79
    %vm85 = vcmask 261120
    %v87 = vsel %vm85, %v65, 0
    %v90 = vsel %vm85, %v66, 0
    %v93 = vsel %vm85, %v67, 0
    %v96 = vsel %vm85, %v68, 0
    %v99 = vsel %vm85, %v69, 0
    %v102 = vsel %vm85, %v70, 0
    %v105 = vsel %vm85, %v71, 0
    %v108 = vsel %vm85, %v72, 0
    %110 = vmatprep.subr.bf16.mxu0 0
    %111 = vmatpush1.bf16.msra.mxu0 %v81
    %112 = vmatprep.subr.bf16.mxu0 0
    %113 = vmatpush1.bf16.msra.mxu0 %v82
    %114 = vmatprep.subr.bf16.mxu0 0
    %115 = vmatpush1.bf16.msra.mxu0 0
    %116 = vmatprep.subr.bf16.mxu0 0
    %117 = vmatpush1.bf16.msra.mxu0 0
    %118 = vmatprep.subr.bf16.mxu0 0
    %119 = vmatpush1.bf16.msra.mxu0 0
    %120 = vmatprep.subr.bf16.mxu0 0
    %121 = vmatpush1.bf16.msra.mxu0 0
    %122 = vmatprep.subr.bf16.mxu0 0
    %123 = vmatpush1.bf16.msra.mxu0 0
    %124 = vmatprep.subr.bf16.mxu0 0
    %125 = vmatpush1.bf16.msra.mxu0 0
    %126 = vmatprep.subr.bf16.mxu0 0
    %127 = vmatpush1.bf16.msra.mxu0 0
    %128 = vmatprep.subr.bf16.mxu0 0
    %129 = vmatpush1.bf16.msra.mxu0 0
    %130 = vmatprep.subr.bf16.mxu0 0
    %131 = vmatpush1.bf16.msra.mxu0 0
    %132 = vmatprep.subr.bf16.mxu0 0
    %133 = vmatpush1.bf16.msra.mxu0 0
    %134 = vmatprep.subr.bf16.mxu0 0
    %135 = vmatpush1.bf16.msra.mxu0 0
    %136 = vmatprep.subr.bf16.mxu0 0
    %137 = vmatpush1.bf16.msra.mxu0 0
    %138 = vmatprep.subr.bf16.mxu0 0
    %139 = vmatpush1.bf16.msra.mxu0 0
    %140 = vmatprep.subr.bf16.mxu0 0
    %141 = vmatpush1.bf16.msra.mxu0 0
    %142 = vmatprep.mubr.bf16.mxu0 0
    %143 = vmatmul.mubr.bf16.gmra.mrb[0].mxu0 %v87
    %v144 = vpop.f32.mrb[0].mxu0
    %v145 = vadd.f32 0.0, %v144
    %v146 = vpop.f32.mrb[0].mxu0
    %v147 = vpop.f32.mrb[0].mxu0
    %v148 = vadd.f32 0.0, %v147
    %v149 = vpop.f32.mrb[0].mxu0
    %150 = vmatprep.mubr.bf16.mxu0 0
    %151 = vmatmul.mubr.bf16.gmra.mrb[0].mxu0 %v90
    %v152 = vpop.f32.mrb[0].mxu0
    %v153 = vadd.f32 0.0, %v152
    %v154 = vpop.f32.mrb[0].mxu0
    %v155 = vpop.f32.mrb[0].mxu0
    %v156 = vadd.f32 0.0, %v155
    %v157 = vpop.f32.mrb[0].mxu0
    %158 = vmatprep.mubr.bf16.mxu0 0
    %159 = vmatmul.mubr.bf16.gmra.mrb[0].mxu0 %v93
    %v160 = vpop.f32.mrb[0].mxu0
    %v161 = vadd.f32 0.0, %v160
    %v162 = vpop.f32.mrb[0].mxu0
    %v163 = vpop.f32.mrb[0].mxu0
    %v164 = vadd.f32 0.0, %v163
    %v165 = vpop.f32.mrb[0].mxu0
    %166 = vmatprep.mubr.bf16.mxu0 0
    %167 = vmatmul.mubr.bf16.gmra.mrb[0].mxu0 %v96
    %v168 = vpop.f32.mrb[0].mxu0
    %v169 = vadd.f32 0.0, %v168
    %v170 = vpop.f32.mrb[0].mxu0
    %v171 = vpop.f32.mrb[0].mxu0
    %v172 = vadd.f32 0.0, %v171
    %v173 = vpop.f32.mrb[0].mxu0
    %174 = vmatprep.mubr.bf16.mxu0 0
    %175 = vmatmul.mubr.bf16.gmra.mrb[0].mxu0 %v99
    %v176 = vpop.f32.mrb[0].mxu0
    %v177 = vadd.f32 0.0, %v176
    %v178 = vpop.f32.mrb[0].mxu0
    %v179 = vpop.f32.mrb[0].mxu0
    %v180 = vadd.f32 0.0, %v179
    %v181 = vpop.f32.mrb[0].mxu0
    %182 = vmatprep.mubr.bf16.mxu0 0
    %183 = vmatmul.mubr.bf16.gmra.mrb[0].mxu0 %v102
    %v184 = vpop.f32.mrb[0].mxu0
    %v185 = vadd.f32 0.0, %v184
    %v186 = vpop.f32.mrb[0].mxu0
    %v187 = vpop.f32.mrb[0].mxu0
    %v188 = vadd.f32 0.0, %v187
    %v189 = vpop.f32.mrb[0].mxu0
    %190 = vmatprep.mubr.bf16.mxu0 0
    %191 = vmatmul.mubr.bf16.gmra.mrb[0].mxu0 %v105
    %v192 = vpop.f32.mrb[0].mxu0
    %v193 = vadd.f32 0.0, %v192
    %v194 = vpop.f32.mrb[0].mxu0
    %v195 = vpop.f32.mrb[0].mxu0
    %v196 = vadd.f32 0.0, %v195
    %v197 = vpop.f32.mrb[0].mxu0
    %198 = vmatprep.mubr.bf16.mxu0 0
    %199 = vmatmul.mubr.bf16.gmra.mrb[0].mxu0 %v108
    %v200 = vpop.f32.mrb[0].mxu0
    %v201 = vadd.f32 0.0, %v200
    %v202 = vpop.f32.mrb[0].mxu0
    %v203 = vpop.f32.mrb[0].mxu0
    %v204 = vadd.f32 0.0, %v203
    %v205 = vpop.f32.mrb[0].mxu0
    %206 = vdwg.mxu0
    %v207 = vpack.c.bf16 %v148, %v145
    %v208 = vpack.c.bf16 %v156, %v153
    %v209 = vpack.c.bf16 %v164, %v161
    %v210 = vpack.c.bf16 %v172, %v169
    %v211 = vpack.c.bf16 %v180, %v177
    %v212 = vpack.c.bf16 %v188, %v185
    %v213 = vpack.c.bf16 %v196, %v193
    %v214 = vpack.c.bf16 %v204, %v201
    %v223 = vunpack.c.l.b16 %v207
    %v224 = vunpack.c.h.b16 %v207
    %v225 = vunpack.c.l.b16 %v208
    %v226 = vunpack.c.h.b16 %v208
    %v227 = vunpack.c.l.b16 %v209
    %v228 = vunpack.c.h.b16 %v209
    %v229 = vunpack.c.l.b16 %v210
    %v230 = vunpack.c.h.b16 %v210
    %v231 = vunpack.c.l.b16 %v211
    %v232 = vunpack.c.h.b16 %v211
    %v233 = vunpack.c.l.b16 %v212
    %v234 = vunpack.c.h.b16 %v212
    %v235 = vunpack.c.l.b16 %v213
    %v236 = vunpack.c.h.b16 %v213
    %v237 = vunpack.c.l.b16 %v214
    %v238 = vunpack.c.h.b16 %v214
    %v239 = vpack.c.b16 %v223, %v223
    %v240 = vpack.c.b16 %v224, %v224
    %v241 = vpack.c.b16 %v225, %v225
    %v242 = vpack.c.b16 %v226, %v226
    %v243 = vpack.c.b16 %v227, %v227
    %v244 = vpack.c.b16 %v228, %v228
    %v245 = vpack.c.b16 %v229, %v229
    %v246 = vpack.c.b16 %v230, %v230
    %v247 = vpack.c.b16 %v231, %v231
    %v248 = vpack.c.b16 %v232, %v232
    %v249 = vpack.c.b16 %v233, %v233
    %v250 = vpack.c.b16 %v234, %v234
    %v251 = vpack.c.b16 %v235, %v235
    %v252 = vpack.c.b16 %v236, %v236
    %v253 = vpack.c.b16 %v237, %v237
    %v254 = vpack.c.b16 %v238, %v238
    %271 = vst [vmem:[#allocation2] sm:$0xf] %v239
    %272 = vst [vmem:[#allocation2 + $0x4] sm:$0xf] %v240
    %273 = vst [vmem:[#allocation2 + $0x8] sm:$0xf] %v241
    %274 = vst [vmem:[#allocation2 + $0xc] sm:$0xf] %v242
    %275 = vst [vmem:[#allocation2 + $0x10] sm:$0xf] %v243
    %276 = vst [vmem:[#allocation2 + $0x14] sm:$0xf] %v244
    %277 = vst [vmem:[#allocation2 + $0x18] sm:$0xf] %v245
    %278 = vst [vmem:[#allocation2 + $0x1c] sm:$0xf] %v246
    %279 = vst [vmem:[#allocation2 + $0x20] sm:$0xf] %v247
    %280 = vst [vmem:[#allocation2 + $0x24] sm:$0xf] %v248
    %281 = vst [vmem:[#allocation2 + $0x28] sm:$0xf] %v249
    %282 = vst [vmem:[#allocation2 + $0x2c] sm:$0xf] %v250
    %283 = vst [vmem:[#allocation2 + $0x30] sm:$0xf] %v251
    %284 = vst [vmem:[#allocation2 + $0x34] sm:$0xf] %v252
    %285 = vst [vmem:[#allocation2 + $0x38] sm:$0xf] %v253
    %286 = vst [vmem:[#allocation2 + $0x3c] sm:$0xf] %v254
    // Predicated region
    $region10: #{tpu_custom_call.1} parent=1 // pred_check
      _
    $region11: #{tpu_custom_call.1} parent=1 // pred_check_branch
      %288 = sbr.rel (0) target = $region13
    $region12: #{tpu_custom_call.1} parent=1 // pred_region
      %s290 = ssub.s32 1024, 1024
      %291 = vsyncadd [#allocation3], %s290
      %s292 = sshll.u32 [#allocation2], 4
      %s293 = int_to_ptr.vmem [resolvable:$true] %s292
      %298 = dma.vmem_to_hbm [thread:$0]  %s293, 1024, %s2, [#allocation3], 64, 64, 4
    $region13: #{tpu_custom_call.1} parent=1 // pred_fallthru
      _
    // Predicated region
    $region14: #{tpu_custom_call.1} parent=1 // pred_check
      _
    $region15: #{tpu_custom_call.1} parent=1 // pred_check_branch
      %300 = sbr.rel (0) target = $region17
    $region16: #{tpu_custom_call.1} parent=1 // pred_region
      %301 = dma.done [#allocation3], 1024
    $region17: #{tpu_custom_call.1} parent=1 // pred_fallthru
      _
    %302 = vsyncpa [#allocation3], 1

</llo_original>
